<compile_context>
chip_gen: v6e
topology: v6e:2x2x1
jax: 0.10.0
libtpu: 0.0.40
codegen_flags: <defaults>
</compile_context>

<pallas_src>
import functools

import jax
import jax.numpy as jnp
from jax import lax
from jax.experimental import pallas as pl
from jax.experimental.pallas import tpu as pltpu


def _round_up(x, m):
    return ((x + m - 1) // m) * m


# ----------------------------------------------------------------------------
# Kernels
# ----------------------------------------------------------------------------
def _gcn_kernel(x_ref, w_ref, b_ref, o_ref, *, negative_slope, use_acti):
    # Single-K path: whole (in_dim, out_dim) weight is VMEM-resident.
    # x_ref: (TM, in_dim); w_ref: (in_dim, out_dim); b_ref: (1, out_dim)
    out = jnp.dot(x_ref[...], w_ref[...], preferred_element_type=jnp.float32)
    out = out + b_ref[...]
    if use_acti:
        out = jnp.where(out >= 0.0, out, negative_slope * out)
    o_ref[...] = out.astype(o_ref.dtype)


def _gcn_kernel_ktiled(x_ref, w_ref, b_ref, o_ref, acc_ref, *,
                       negative_slope, use_acti, in_dim, block_k, mask_k):
    # K-tiled path: grid = (grid_m, grid_k), f32 accumulator in VMEM scratch.
    # x_ref: (TM, BK); w_ref: (BK, out_dim); acc_ref: (TM, out_dim) f32.
    k = pl.program_id(1)

    @pl.when(k == 0)
    def _():
        acc_ref[...] = jnp.zeros_like(acc_ref)

    x = x_ref[...]
    w = w_ref[...]
    if mask_k:
        # Tail K block: zero the out-of-range columns/rows (Pallas leaves
        # garbage in the unloaded part of a partial block) so they cannot
        # pollute the accumulator.
        col = k * block_k + lax.broadcasted_iota(jnp.int32, x.shape, 1)
        x = jnp.where(col < in_dim, x, 0.0)
        row = k * block_k + lax.broadcasted_iota(jnp.int32, w.shape, 0)
        w = jnp.where(row < in_dim, w, 0.0)

    acc_ref[...] += jnp.dot(x, w, preferred_element_type=jnp.float32)

    @pl.when(k == pl.num_programs(1) - 1)
    def _():
        out = acc_ref[...] + b_ref[...]
        if use_acti:
            out = jnp.where(out >= 0.0, out, negative_slope * out)
        o_ref[...] = out.astype(o_ref.dtype)


# ----------------------------------------------------------------------------
# Tile / budget selection
# ----------------------------------------------------------------------------
def _vmem_budget_bytes():
    """~75% of physical VMEM: ~96 MiB on v5e/v6e (128 MiB), ~48 MiB on v7x (64 MiB)."""
    try:
        phys = int(pltpu.get_tpu_info().vmem_capacity_bytes)
    except Exception:
        phys = 64 << 20  # conservative: valid on every generation
    return (phys * 3) // 4


def _pick_tiles(n, in_dim, out_dim, itemsize, budget, block_m=None, block_k=None):
    """Choose (block_m, block_k).  block_k == in_dim means no K-tiling."""
    # Packed sublane tile for the dtype: 8 (f32), 16 (bf16), 32 (int8/fp8).
    sub = max(8, 32 // itemsize)
    tile_budget = (budget * 4) // 5  # ~20% headroom for Mosaic internal scratch
    bias_b = out_dim * itemsize

    if block_k is None:
        w_b = in_dim * out_dim * itemsize
        per_row_single = 2 * (in_dim + out_dim) * itemsize
        tm_single = (tile_budget - w_b - bias_b) // per_row_single
        can_ktile = in_dim > 128  # K blocks must be 128-multiples smaller than in_dim
        if (not can_ktile) or tm_single >= 512 or tm_single >= _round_up(n, sub):
            block_k = in_dim
        else:
            # Double-buffered (block_k, out_dim) weight slabs <= ~budget/2.
            bk = (tile_budget // 4) // (2 * out_dim * itemsize)
            bk = max(128, (bk // 128) * 128)
            block_k = int(min(bk, (in_dim // 128) * 128))

    if block_m is None:
        if block_k >= in_dim:
            # Weight single-buffered (grid-invariant), x/out double-buffered.
            resident = in_dim * out_dim * itemsize + bias_b
            per_row = 2 * (in_dim + out_dim) * itemsize
        else:
            # Weight slabs double-buffered + f32 accumulator scratch.
            resident = 2 * block_k * out_dim * itemsize + 2 * bias_b
            per_row = 2 * (block_k + out_dim) * itemsize + out_dim * 4
        tm = (tile_budget - resident) // per_row
        tm = min(int(tm), 8192)
        if n >= 256:
            # Keep >= 2 grid steps so both v7x TensorCores get work
            # (harmless on single-TC v5e/v6e).
            tm = min(tm, _round_up(pl.cdiv(n, 2), sub))
        tm = max((tm // sub) * sub, sub)
        block_m = min(tm, _round_up(n, sub))

    return int(block_m), int(block_k)


# ----------------------------------------------------------------------------
# Wrapper
# ----------------------------------------------------------------------------
def gcn_layer(x, weight, bias, *, acti=True, negative_slope=0.3,
              block_m=None, block_k=None, vmem_budget_bytes=None):
    """GCNLayer.forward:  LeakyReLU(0.3)(x @ weight.T + bias)  (acti optional).

    x: (N, in_dim); weight: (out_dim, in_dim) [PyTorch layout]; bias: (out_dim,).
    """
    n, in_dim = x.shape
    out_dim = weight.shape[0]
    itemsize = jnp.dtype(x.dtype).itemsize

    budget = _vmem_budget_bytes() if vmem_budget_bytes is None else int(vmem_budget_bytes)
    block_m, block_k = _pick_tiles(n, in_dim, out_dim, itemsize, budget,
                                   block_m, block_k)

    # One-time wrapper transpose of the grid-invariant weight: contract the
    # MXU-friendly (in_dim, out_dim) layout instead of a transposed operand.
    wt = weight.T
    b2 = bias.reshape(1, out_dim)

    grid_m = pl.cdiv(n, block_m)
    grid_k = pl.cdiv(in_dim, block_k)

    cost = pl.CostEstimate(
        flops=2 * n * in_dim * out_dim,
        transcendentals=0,
        bytes_accessed=itemsize * (n * in_dim + in_dim * out_dim + out_dim
                                   + n * out_dim),
    )

    def build(single_buffer_resident):
        resident_mode = {}
        if single_buffer_resident:
            # Grid-invariant blocks: a second buffer only burns VMEM.
            resident_mode = dict(pipeline_mode=pl.Buffered(1))

        if grid_k == 1:
            kernel = functools.partial(
                _gcn_kernel, negative_slope=negative_slope, use_acti=acti)
            grid = (grid_m,)
            in_specs = [
                pl.BlockSpec((block_m, in_dim), lambda i: (i, 0)),
                pl.BlockSpec((in_dim, out_dim), lambda i: (0, 0), **resident_mode),
                pl.BlockSpec((1, out_dim), lambda i: (0, 0), **resident_mode),
            ]
            out_spec = pl.BlockSpec((block_m, out_dim), lambda i: (i, 0))
            scratch = []
            dims = ("parallel",)
        else:
            kernel = functools.partial(
                _gcn_kernel_ktiled, negative_slope=negative_slope, use_acti=acti,
                in_dim=in_dim, block_k=block_k, mask_k=(in_dim % block_k != 0))
            grid = (grid_m, grid_k)
            in_specs = [
                pl.BlockSpec((block_m, block_k), lambda i, k: (i, k)),
                pl.BlockSpec((block_k, out_dim), lambda i, k: (k, 0)),
                pl.BlockSpec((1, out_dim), lambda i, k: (0, 0), **resident_mode),
            ]
            out_spec = pl.BlockSpec((block_m, out_dim), lambda i, k: (i, 0))
            scratch = [pltpu.VMEM((block_m, out_dim), jnp.float32)]
            dims = ("parallel", "arbitrary")

        return pl.pallas_call(
            kernel,
            out_shape=jax.ShapeDtypeStruct((n, out_dim), x.dtype),
            grid=grid,
            in_specs=in_specs,
            out_specs=out_spec,
            scratch_shapes=scratch,
            compiler_params=pltpu.CompilerParams(
                dimension_semantics=dims,
                vmem_limit_bytes=int(budget),
            ),
            cost_estimate=cost,
        )(x, wt, b2)

    try:
        return build(single_buffer_resident=True)
    except Exception:
        # Safety net: if this Pallas build rejects pl.Buffered(1) on the
        # grid-invariant operands, fall back to default double-buffering.
        return build(single_buffer_resident=False)


# ----------------------------------------------------------------------------
# Reference + tests
# ----------------------------------------------------------------------------
def _xavier_uniform(key, out_dim, in_dim, dtype=jnp.float32):
    # Matches torch.nn.init.xavier_uniform_ for a (out_dim, in_dim) matrix.
    limit = (6.0 / (in_dim + out_dim)) ** 0.5
    return jax.random.uniform(key, (out_dim, in_dim), dtype=dtype,
                              minval=-limit, maxval=limit)


def _ref_forward(x, weight, bias, acti=True, negative_slope=0.3):
    out = x @ weight.T + bias
    if acti:
        out = jnp.where(out >= 0.0, out, negative_slope * out)
    return out


if __name__ == "__main__":
    key = jax.random.PRNGKey(0)
    keys = jax.random.split(key, 9)

    # Case 1: small shapes consistent with GCNLayer.forward (F is (nodes, in_dim)).
    num_nodes, in_dim, out_dim = 8, 32, 32
    x = jax.random.normal(keys[0], (num_nodes, in_dim), dtype=jnp.float32)
    weight = _xavier_uniform(keys[1], out_dim, in_dim)          # (out_dim, in_dim)
    bound = 1.0 / (in_dim ** 0.5)                               # nn.Linear bias init
    bias = jax.random.uniform(keys[2], (out_dim,), minval=-bound, maxval=bound)

    out = gcn_layer(x, weight, bias, acti=True)
    jax.block_until_ready(out)
    ref = _ref_forward(x, weight, bias, acti=True)
    assert out.shape == (num_nodes, out_dim)
    assert jnp.allclose(out, ref, atol=1e-5, rtol=1e-5), "case 1 mismatch"

    # Case 2: non-divisible N and non-128 out_dim, multi-tile row grid, no
    # activation (exercises tail-row masking and masked lane stores).
    n2, in2, od2 = 300, 64, 48
    x2 = jax.random.normal(keys[3], (n2, in2), dtype=jnp.float32)
    w2 = _xavier_uniform(keys[4], od2, in2)
    b2 = jax.random.uniform(keys[5], (od2,), minval=-0.1, maxval=0.1)

    out2 = gcn_layer(x2, w2, b2, acti=False, block_m=128)
    jax.block_until_ready(out2)
    ref2 = _ref_forward(x2, w2, b2, acti=False)
    assert out2.shape == (n2, od2)
    assert jnp.allclose(out2, ref2, atol=1e-5, rtol=1e-5), "case 2 mismatch"

    # Case 3: forced K-tiling (grid_k=2) with a non-divisible in_dim tail,
    # exercising the accumulator path and in-kernel K masking.
    n3, in3, od3 = 100, 200, 40
    x3 = jax.random.normal(keys[6], (n3, in3), dtype=jnp.float32)
    w3 = _xavier_uniform(keys[7], od3, in3)
    b3 = jax.random.uniform(keys[8], (od3,), minval=-0.1, maxval=0.1)

    out3 = gcn_layer(x3, w3, b3, acti=True, block_m=64, block_k=128)
    jax.block_until_ready(out3)
    ref3 = _ref_forward(x3, w3, b3, acti=True)
    assert out3.shape == (n3, od3)
    assert jnp.allclose(out3, ref3, atol=1e-4, rtol=1e-5), "case 3 mismatch"

    print("KERNEL_OK")
</pallas_src>

<mosaic_0001>
module attributes {stable_mosaic.version = 11 : i64} {
  func.func @_gcn_kernel(%arg0: i32, %arg1: memref<8x32xf32, #tpu.memory_space<vmem>>, %arg2: memref<32x32xf32, #tpu.memory_space<vmem>>, %arg3: memref<1x32xf32, #tpu.memory_space<vmem>>, %arg4: memref<8x32xf32, #tpu.memory_space<vmem>>) attributes {dimension_semantics = [#tpu.dimension_semantics<parallel>], iteration_bounds = array<i64: 1>, scalar_prefetch = 0 : i64, scratch_operands = 0 : i64, tpu.core_type = #tpu.core_type<tc>, window_params = [{transform_indices = @transform_0, window_bounds = array<i64: 8, 32>}, {pipeline_mode = #tpu.pipeline_mode<synchronous>, transform_indices = @transform_1, window_bounds = array<i64: 32, 32>}, {pipeline_mode = #tpu.pipeline_mode<synchronous>, transform_indices = @transform_2, window_bounds = array<i64: 1, 32>}, {transform_indices = @transform_3, window_bounds = array<i64: 8, 32>}]} {
    %c0 = arith.constant 0 : index
    %c0_0 = arith.constant 0 : index
    %0 = vector.load %arg1[%c0, %c0_0] : memref<8x32xf32, #tpu.memory_space<vmem>>, vector<8x32xf32>
    %c0_1 = arith.constant 0 : index
    %c0_2 = arith.constant 0 : index
    %1 = vector.load %arg2[%c0_1, %c0_2] : memref<32x32xf32, #tpu.memory_space<vmem>>, vector<32x32xf32>
    %cst = arith.constant dense<0.000000e+00> : vector<8x32xf32>
    %2 = tpu.matmul %0, %1, %cst {dimension_numbers = #tpu.dot_dimension_numbers<[1], [0], [0], [1], [0, 0, 1, 1], [], []>} : vector<8x32xf32>, vector<32x32xf32>, vector<8x32xf32> -> vector<8x32xf32>
    %c0_3 = arith.constant 0 : index
    %c0_4 = arith.constant 0 : index
    %3 = vector.load %arg3[%c0_3, %c0_4] : memref<1x32xf32, #tpu.memory_space<vmem>>, vector<1x32xf32>
    %4 = vector.broadcast %3 : vector<1x32xf32> to vector<8x32xf32>
    %5 = arith.addf %2, %4 : vector<8x32xf32>
    %cst_5 = arith.constant 0.000000e+00 : f32
    %6 = vector.broadcast %cst_5 : f32 to vector<8x32xf32>
    %7 = arith.cmpf oge, %5, %6 : vector<8x32xf32>
    %cst_6 = arith.constant 3.000000e-01 : f32
    %8 = vector.broadcast %cst_6 : f32 to vector<8x32xf32>
    %9 = arith.mulf %8, %5 : vector<8x32xf32>
    %10 = arith.select %7, %5, %9 : vector<8x32xi1>, vector<8x32xf32>
    %c0_7 = arith.constant 0 : index
    %c0_8 = arith.constant 0 : index
    %11 = vector.load %arg4[%c0_7, %c0_8] : memref<8x32xf32, #tpu.memory_space<vmem>>, vector<8x32xf32>
    tpu.vector_store %arg4[%c0_7, %c0_8], %10 {strides = array<i32>} : memref<8x32xf32, #tpu.memory_space<vmem>>, vector<8x32xf32>,
    return
  }
  func.func @transform_0(%arg0: i32) -> (i32, i32) {
    %c0_i32 = arith.constant 0 : i32
    %c0_i32_0 = arith.constant 0 : i32
    return %arg0, %c0_i32 : i32, i32
  }
  func.func @transform_1(%arg0: i32) -> (i32, i32) {
    %c0_i32 = arith.constant 0 : i32
    %c0_i32_0 = arith.constant 0 : i32
    %c0_i32_1 = arith.constant 0 : i32
    return %c0_i32, %c0_i32_0 : i32, i32
  }
  func.func @transform_2(%arg0: i32) -> (i32, i32) {
    %c0_i32 = arith.constant 0 : i32
    %c0_i32_0 = arith.constant 0 : i32
    %c0_i32_1 = arith.constant 0 : i32
    return %c0_i32, %c0_i32_0 : i32, i32
  }
  func.func @transform_3(%arg0: i32) -> (i32, i32) {
    %c0_i32 = arith.constant 0 : i32
    %c0_i32_0 = arith.constant 0 : i32
    return %arg0, %c0_i32 : i32, i32
  }
}

module attributes {stable_mosaic.version = 11 : i64} {
  func.func @_gcn_kernel(%arg0: i32, %arg1: memref<8x32xf32, #tpu.memory_space<vmem>>, %arg2: memref<32x32xf32, #tpu.memory_space<vmem>>, %arg3: memref<1x32xf32, #tpu.memory_space<vmem>>, %arg4: memref<8x32xf32, #tpu.memory_space<vmem>>) attributes {dimension_semantics = [#tpu.dimension_semantics<parallel>], iteration_bounds = array<i64: 1>, scalar_prefetch = 0 : i64, scratch_operands = 0 : i64, tpu.core_type = #tpu.core_type<tc>, window_params = [{transform_indices = @transform_0, window_bounds = array<i64: 8, 32>}, {pipeline_mode = #tpu.pipeline_mode<synchronous>, transform_indices = @transform_1, window_bounds = array<i64: 32, 32>}, {pipeline_mode = #tpu.pipeline_mode<synchronous>, transform_indices = @transform_2, window_bounds = array<i64: 1, 32>}, {transform_indices = @transform_3, window_bounds = array<i64: 8, 32>}]} {
    %c0 = arith.constant 0 : index
    %c0_0 = arith.constant 0 : index
    %0 = vector.load %arg1[%c0, %c0_0] : memref<8x32xf32, #tpu.memory_space<vmem>>, vector<8x32xf32>
    %c0_1 = arith.constant 0 : index
    %c0_2 = arith.constant 0 : index
    %1 = vector.load %arg2[%c0_1, %c0_2] : memref<32x32xf32, #tpu.memory_space<vmem>>, vector<32x32xf32>
    %cst = arith.constant dense<0.000000e+00> : vector<8x32xf32>
    %2 = tpu.matmul %0, %1, %cst {dimension_numbers = #tpu.dot_dimension_numbers<[1], [0], [0], [1], [0, 0, 1, 1], [], []>} : vector<8x32xf32>, vector<32x32xf32>, vector<8x32xf32> -> vector<8x32xf32>
    %c0_3 = arith.constant 0 : index
    %c0_4 = arith.constant 0 : index
    %3 = vector.load %arg3[%c0_3, %c0_4] : memref<1x32xf32, #tpu.memory_space<vmem>>, vector<1x32xf32>
    %4 = vector.broadcast %3 : vector<1x32xf32> to vector<8x32xf32>
    %5 = arith.addf %2, %4 : vector<8x32xf32>
    %cst_5 = arith.constant 0.000000e+00 : f32
    %6 = vector.broadcast %cst_5 : f32 to vector<8x32xf32>
    %7 = arith.cmpf oge, %5, %6 : vector<8x32xf32>
    %cst_6 = arith.constant 3.000000e-01 : f32
    %8 = vector.broadcast %cst_6 : f32 to vector<8x32xf32>
    %9 = arith.mulf %8, %5 : vector<8x32xf32>
    %10 = arith.select %7, %5, %9 : vector<8x32xi1>, vector<8x32xf32>
    %c0_7 = arith.constant 0 : index
    %c0_8 = arith.constant 0 : index
    %11 = vector.load %arg4[%c0_7, %c0_8] : memref<8x32xf32, #tpu.memory_space<vmem>>, vector<8x32xf32>
    tpu.vector_store %arg4[%c0_7, %c0_8], %10 {strides = array<i32>} : memref<8x32xf32, #tpu.memory_space<vmem>>, vector<8x32xf32>,
    return
  }
  func.func @transform_0(%arg0: i32) -> (i32, i32) {
    %c0_i32 = arith.constant 0 : i32
    %c0_i32_0 = arith.constant 0 : i32
    return %arg0, %c0_i32 : i32, i32
  }
  func.func @transform_1(%arg0: i32) -> (i32, i32) {
    %c0_i32 = arith.constant 0 : i32
    %c0_i32_0 = arith.constant 0 : i32
    %c0_i32_1 = arith.constant 0 : i32
    return %c0_i32, %c0_i32_0 : i32, i32
  }
  func.func @transform_2(%arg0: i32) -> (i32, i32) {
    %c0_i32 = arith.constant 0 : i32
    %c0_i32_0 = arith.constant 0 : i32
    %c0_i32_1 = arith.constant 0 : i32
    return %c0_i32, %c0_i32_0 : i32, i32
  }
  func.func @transform_3(%arg0: i32) -> (i32, i32) {
    %c0_i32 = arith.constant 0 : i32
    %c0_i32_0 = arith.constant 0 : i32
    return %arg0, %c0_i32 : i32, i32
  }
}

</mosaic_0001>

<llo_original>
// kernel: tpu_custom_call.1
$region0: #{tpu_custom_call.1}
  #allocation0 [shape = 'u32[]', space=smem, size = 0x4, offset = 0x4, fixed_abs, tag = 'smem constant byte address 0x4 - core index']
  #allocation1 [shape = 'u32[144,128]{1,0:T(1,128)}', space=vmem, size = 0x12000, scoped, tag = 'internal scratch']
  %s0 = inlined_call_operand.hbm [shape: f32[8,32], index: 0, kind: input, shape index: {}]
  %s1 = inlined_call_operand.hbm [shape: f32[32,32], index: 1, kind: input, shape index: {}]
  %s2 = inlined_call_operand.vmem [shape: f32[1,32], index: 2, kind: input, shape index: {}]
  %s3 = inlined_call_operand.hbm [shape: f32[8,32], index: 3, kind: output, shape index: {}]
  %s4 = sld [smem:[#allocation0]]
  $region30: #{tpu_custom_call.1} parent=0
    _
  %s6 = ssub.s32 1, %s4
  %s7 = scalar_select 0, %s6, %s4
  $region1: #{tpu_custom_call.1} parent=0
    #allocation2 [shape = 'u8[4096]{0}', space=vmem, size = 0x1000, scoped, tag = 'input window, operand 0, single buffered']
    #allocation3 [shape = 's32[1]{0}', space=sflag, size = 0x4, scoped, tag = 'scoped memory for tpu_custom_call.1']
    #allocation4 [shape = 's32[1]{0}', space=sflag, size = 0x4, scoped, tag = 'scoped memory for tpu_custom_call.1']
    #allocation5 [shape = 'u8[16384]{0}', space=vmem, size = 0x4000, scoped, tag = 'input window, operand 1, single buffered']
    #allocation6 [shape = 's32[1]{0}', space=sflag, size = 0x4, scoped, tag = 'scoped memory for tpu_custom_call.1']
    #allocation7 [shape = 'u8[4096]{0}', space=vmem, size = 0x1000, scoped, tag = 'output window, operand 0, single buffered']
    %8 = vsyncpa [#allocation3], 0
    %9 = vsyncpa [#allocation6], 0
    %10 = vsyncpa [#allocation4], 0
    // Predicated region
    $region2: #{tpu_custom_call.1} parent=1 // pred_check
      _
    $region3: #{tpu_custom_call.1} parent=1 // pred_check_branch
      %12 = sbr.rel (0) target = $region5
    $region4: #{tpu_custom_call.1} parent=1 // pred_region
      %s14 = ssub.s32 128, 128
      %15 = vsyncadd [#allocation3], %s14
      %s17 = sshll.u32 [#allocation2], 4
      %s18 = int_to_ptr.vmem [resolvable:$true] %s17
      %20 = dma.hbm_to_vmem [thread:$0]  %s0, 128, %s18, [#allocation3]
    $region5: #{tpu_custom_call.1} parent=1 // pred_fallthru
      _
    // Predicated region
    $region6: #{tpu_custom_call.1} parent=1 // pred_check
      _
    $region7: #{tpu_custom_call.1} parent=1 // pred_check_branch
      %22 = sbr.rel (0) target = $region9
    $region8: #{tpu_custom_call.1} parent=1 // pred_region
      %s24 = ssub.s32 512, 512
      %25 = vsyncadd [#allocation6], %s24
      %s26 = sshll.u32 [#allocation5], 4
      %s27 = int_to_ptr.vmem [resolvable:$true] %s26
      %32 = dma.hbm_to_vmem [thread:$0]  %s1, 512, %s27, [#allocation6], 128, 128, 8
    $region9: #{tpu_custom_call.1} parent=1 // pred_fallthru
      _
    // Predicated region
    $region10: #{tpu_custom_call.1} parent=1 // pred_check
      _
    $region11: #{tpu_custom_call.1} parent=1 // pred_check_branch
      %34 = sbr.rel (0) target = $region13
    $region12: #{tpu_custom_call.1} parent=1 // pred_region
      _
    $region13: #{tpu_custom_call.1} parent=1 // pred_fallthru
      _
    // Predicated region
    $region14: #{tpu_custom_call.1} parent=1 // pred_check
      _
    $region15: #{tpu_custom_call.1} parent=1 // pred_check_branch
      %36 = sbr.rel (0) target = $region17
    $region16: #{tpu_custom_call.1} parent=1 // pred_region
      %37 = dma.done [#allocation3], 128
    $region17: #{tpu_custom_call.1} parent=1 // pred_fallthru
      _
    // Predicated region
    $region18: #{tpu_custom_call.1} parent=1 // pred_check
      _
    $region19: #{tpu_custom_call.1} parent=1 // pred_check_branch
      %39 = sbr.rel (0) target = $region21
    $region20: #{tpu_custom_call.1} parent=1 // pred_region
      %40 = dma.done [#allocation6], 512
    $region21: #{tpu_custom_call.1} parent=1 // pred_fallthru
      _
    %v41 = vld [vmem:[#allocation2] sm:$0xff]
    %v42 = vld [vmem:[#allocation5] sm:$0xff]
    %v43 = vld [vmem:[#allocation5 + $0x8] sm:$0xff]
    %v44 = vld [vmem:[#allocation5 + $0x10] sm:$0xff]
    %v45 = vld [vmem:[#allocation5 + $0x18] sm:$0xff]
    %v46 = vld [vmem:[%s2] sm:$0x1]
    %v48 = vlaneseq
    %v49 = vshrl.u32 %v48, 7
    %v50 = vsub.s32 0, %v49
    %v51 = vrot.slane %v46, %v50
    %vm53 = vcmask 261120
    %v55 = vsel %vm53, %v41, 0
    %57 = vmatprep.subr.mxu0 0.0
    %58 = vmatpush1.msra.mxu0 0.0
    %59 = vmatprep.subr.mxu0 0.0
    %60 = vmatpush1.msra.mxu0 0.0
    %61 = vmatprep.subr.mxu0 0.0
    %62 = vmatpush1.msra.mxu0 0.0
    %63 = vmatprep.subr.mxu0 0.0
    %64 = vmatpush1.msra.mxu0 0.0
    %65 = vmatprep.subr.mxu0 0.0
    %66 = vmatpush1.msra.mxu0 0.0
    %67 = vmatprep.subr.mxu0 0.0
    %68 = vmatpush1.msra.mxu0 0.0
    %69 = vmatprep.subr.mxu0 0.0
    %70 = vmatpush1.msra.mxu0 0.0
    %71 = vmatprep.subr.mxu0 0.0
    %72 = vmatpush1.msra.mxu0 0.0
    %73 = vmatprep.subr.mxu0 0.0
    %74 = vmatpush1.msra.mxu0 0.0
    %75 = vmatprep.subr.mxu0 0.0
    %76 = vmatpush1.msra.mxu0 0.0
    %77 = vmatprep.subr.mxu0 0.0
    %78 = vmatpush1.msra.mxu0 0.0
    %79 = vmatprep.subr.mxu0 0.0
    %80 = vmatpush1.msra.mxu0 0.0
    %81 = vmatprep.subr.mxu0 0.0
    %82 = vmatpush1.msra.mxu0 %v45
    %83 = vmatprep.subr.mxu0 0.0
    %84 = vmatpush1.msra.mxu0 %v44
    %85 = vmatprep.subr.mxu0 0.0
    %86 = vmatpush1.msra.mxu0 %v43
    %87 = vmatprep.subr.mxu0 0.0
    %88 = vmatpush1.msra.mxu0 %v42
    %89 = vmatprep.subr.mxu0 0.0
    %90 = vmatpush2.msra.mxu0 0.0
    %91 = vmatprep.subr.mxu0 0.0
    %92 = vmatpush2.msra.mxu0 0.0
    %93 = vmatprep.subr.mxu0 0.0
    %94 = vmatpush2.msra.mxu0 0.0
    %95 = vmatprep.subr.mxu0 0.0
    %96 = vmatpush2.msra.mxu0 0.0
    %97 = vmatprep.subr.mxu0 0.0
    %98 = vmatpush2.msra.mxu0 0.0
    %99 = vmatprep.subr.mxu0 0.0
    %100 = vmatpush2.msra.mxu0 0.0
    %101 = vmatprep.subr.mxu0 0.0
    %102 = vmatpush2.msra.mxu0 0.0
    %103 = vmatprep.subr.mxu0 0.0
    %104 = vmatpush2.msra.mxu0 0.0
    %105 = vmatprep.subr.mxu0 0.0
    %106 = vmatpush2.msra.mxu0 0.0
    %107 = vmatprep.subr.mxu0 0.0
    %108 = vmatpush2.msra.mxu0 0.0
    %109 = vmatprep.subr.mxu0 0.0
    %110 = vmatpush2.msra.mxu0 0.0
    %111 = vmatprep.subr.mxu0 0.0
    %112 = vmatpush2.msra.mxu0 0.0
    %113 = vmatprep.subr.mxu0 0.0
    %114 = vmatpush2.msra.mxu0 0.0
    %115 = vmatprep.subr.mxu0 0.0
    %116 = vmatpush2.msra.mxu0 0.0
    %117 = vmatprep.subr.mxu0 0.0
    %118 = vmatpush2.msra.mxu0 0.0
    %119 = vmatprep.subr.mxu0 0.0
    %120 = vmatpush2.msra.mxu0 0.0
    %121 = vmatprep.mubr.f32.mxu0 0.0
    %122 = vmatmul.mubr.f32.gmra.mxu0 %v55
    %v123 = vpop.f32.mrf.mxu0
    %v124 = vadd.f32 %v51, %v123
    %v125 = vpop.f32.mrf.mxu0
    %126 = vdwg.mxu0
    %vm127 = vcmp.ge.f32.partialorder %v124, 0.0
    %v128 = vmul.f32 %v124, 0.3
    %v129 = vsel %vm127, %v124, %v128
    %130 = vst.msk [vmem:[#allocation7] sm:$0xff] %vm53, %v129
    // Predicated region
    $region22: #{tpu_custom_call.1} parent=1 // pred_check
      _
    $region23: #{tpu_custom_call.1} parent=1 // pred_check_branch
      %132 = sbr.rel (0) target = $region25
    $region24: #{tpu_custom_call.1} parent=1 // pred_region
      %s134 = ssub.s32 128, 128
      %135 = vsyncadd [#allocation4], %s134
      %s137 = sshll.u32 [#allocation7], 4
      %s138 = int_to_ptr.vmem [resolvable:$true] %s137
      %140 = dma.vmem_to_hbm [thread:$0]  %s138, 128, %s3, [#allocation4]
    $region25: #{tpu_custom_call.1} parent=1 // pred_fallthru
      _
    // Predicated region
    $region26: #{tpu_custom_call.1} parent=1 // pred_check
      _
    $region27: #{tpu_custom_call.1} parent=1 // pred_check_branch
      %142 = sbr.rel (0) target = $region29
    $region28: #{tpu_custom_call.1} parent=1 // pred_region
      %143 = dma.done [#allocation4], 128
    $region29: #{tpu_custom_call.1} parent=1 // pred_fallthru
      _
    %144 = vsyncpa [#allocation3], 1
    %145 = vsyncpa [#allocation6], 1
    %146 = vsyncpa [#allocation4], 1

// kernel: tpu_custom_call.1
$region0: #{tpu_custom_call.1}
  #allocation0 [shape = 'u32[]', space=smem, size = 0x4, offset = 0x4, fixed_abs, tag = 'smem constant byte address 0x4 - core index']
  #allocation1 [shape = 'u32[144,128]{1,0:T(1,128)}', space=vmem, size = 0x12000, scoped, tag = 'internal scratch']
  %s0 = inlined_call_operand.hbm [shape: f32[8,32], index: 0, kind: input, shape index: {}]
  %s1 = inlined_call_operand.hbm [shape: f32[32,32], index: 1, kind: input, shape index: {}]
  %s2 = inlined_call_operand.vmem [shape: f32[1,32], index: 2, kind: input, shape index: {}]
  %s3 = inlined_call_operand.hbm [shape: f32[8,32], index: 3, kind: output, shape index: {}]
  %s4 = sld [smem:[#allocation0]]
  $region30: #{tpu_custom_call.1} parent=0
    _
  %s6 = ssub.s32 1, %s4
  %s7 = scalar_select 0, %s6, %s4
  $region1: #{tpu_custom_call.1} parent=0
    #allocation2 [shape = 'u8[4096]{0}', space=vmem, size = 0x1000, scoped, tag = 'input window, operand 0, single buffered']
    #allocation3 [shape = 's32[1]{0}', space=sflag, size = 0x4, scoped, tag = 'scoped memory for tpu_custom_call.1']
    #allocation4 [shape = 's32[1]{0}', space=sflag, size = 0x4, scoped, tag = 'scoped memory for tpu_custom_call.1']
    #allocation5 [shape = 'u8[16384]{0}', space=vmem, size = 0x4000, scoped, tag = 'input window, operand 1, single buffered']
    #allocation6 [shape = 's32[1]{0}', space=sflag, size = 0x4, scoped, tag = 'scoped memory for tpu_custom_call.1']
    #allocation7 [shape = 'u8[4096]{0}', space=vmem, size = 0x1000, scoped, tag = 'output window, operand 0, single buffered']
    %8 = vsyncpa [#allocation3], 0
    %9 = vsyncpa [#allocation6], 0
    %10 = vsyncpa [#allocation4], 0
    // Predicated region
    $region2: #{tpu_custom_call.1} parent=1 // pred_check
      _
    $region3: #{tpu_custom_call.1} parent=1 // pred_check_branch
      %12 = sbr.rel (0) target = $region5
    $region4: #{tpu_custom_call.1} parent=1 // pred_region
      %s14 = ssub.s32 128, 128
      %15 = vsyncadd [#allocation3], %s14
      %s17 = sshll.u32 [#allocation2], 4
      %s18 = int_to_ptr.vmem [resolvable:$true] %s17
      %20 = dma.hbm_to_vmem [thread:$0]  %s0, 128, %s18, [#allocation3]
    $region5: #{tpu_custom_call.1} parent=1 // pred_fallthru
      _
    // Predicated region
    $region6: #{tpu_custom_call.1} parent=1 // pred_check
      _
    $region7: #{tpu_custom_call.1} parent=1 // pred_check_branch
      %22 = sbr.rel (0) target = $region9
    $region8: #{tpu_custom_call.1} parent=1 // pred_region
      %s24 = ssub.s32 512, 512
      %25 = vsyncadd [#allocation6], %s24
      %s26 = sshll.u32 [#allocation5], 4
      %s27 = int_to_ptr.vmem [resolvable:$true] %s26
      %32 = dma.hbm_to_vmem [thread:$0]  %s1, 512, %s27, [#allocation6], 128, 128, 8
    $region9: #{tpu_custom_call.1} parent=1 // pred_fallthru
      _
    // Predicated region
    $region10: #{tpu_custom_call.1} parent=1 // pred_check
      _
    $region11: #{tpu_custom_call.1} parent=1 // pred_check_branch
      %34 = sbr.rel (0) target = $region13
    $region12: #{tpu_custom_call.1} parent=1 // pred_region
      _
    $region13: #{tpu_custom_call.1} parent=1 // pred_fallthru
      _
    // Predicated region
    $region14: #{tpu_custom_call.1} parent=1 // pred_check
      _
    $region15: #{tpu_custom_call.1} parent=1 // pred_check_branch
      %36 = sbr.rel (0) target = $region17
    $region16: #{tpu_custom_call.1} parent=1 // pred_region
      %37 = dma.done [#allocation3], 128
    $region17: #{tpu_custom_call.1} parent=1 // pred_fallthru
      _
    // Predicated region
    $region18: #{tpu_custom_call.1} parent=1 // pred_check
      _
    $region19: #{tpu_custom_call.1} parent=1 // pred_check_branch
      %39 = sbr.rel (0) target = $region21
    $region20: #{tpu_custom_call.1} parent=1 // pred_region
      %40 = dma.done [#allocation6], 512
    $region21: #{tpu_custom_call.1} parent=1 // pred_fallthru
      _
    %v41 = vld [vmem:[#allocation2] sm:$0xff]
    %v42 = vld [vmem:[#allocation5] sm:$0xff]
    %v43 = vld [vmem:[#allocation5 + $0x8] sm:$0xff]
    %v44 = vld [vmem:[#allocation5 + $0x10] sm:$0xff]
    %v45 = vld [vmem:[#allocation5 + $0x18] sm:$0xff]
    %v46 = vld [vmem:[%s2] sm:$0x1]
    %v48 = vlaneseq
    %v49 = vshrl.u32 %v48, 7
    %v50 = vsub.s32 0, %v49
    %v51 = vrot.slane %v46, %v50
    %vm53 = vcmask 261120
    %v55 = vsel %vm53, %v41, 0
    %57 = vmatprep.subr.mxu0 0.0
    %58 = vmatpush1.msra.mxu0 0.0
    %59 = vmatprep.subr.mxu0 0.0
    %60 = vmatpush1.msra.mxu0 0.0
    %61 = vmatprep.subr.mxu0 0.0
    %62 = vmatpush1.msra.mxu0 0.0
    %63 = vmatprep.subr.mxu0 0.0
    %64 = vmatpush1.msra.mxu0 0.0
    %65 = vmatprep.subr.mxu0 0.0
    %66 = vmatpush1.msra.mxu0 0.0
    %67 = vmatprep.subr.mxu0 0.0
    %68 = vmatpush1.msra.mxu0 0.0
    %69 = vmatprep.subr.mxu0 0.0
    %70 = vmatpush1.msra.mxu0 0.0
    %71 = vmatprep.subr.mxu0 0.0
    %72 = vmatpush1.msra.mxu0 0.0
    %73 = vmatprep.subr.mxu0 0.0
    %74 = vmatpush1.msra.mxu0 0.0
    %75 = vmatprep.subr.mxu0 0.0
    %76 = vmatpush1.msra.mxu0 0.0
    %77 = vmatprep.subr.mxu0 0.0
    %78 = vmatpush1.msra.mxu0 0.0
    %79 = vmatprep.subr.mxu0 0.0
    %80 = vmatpush1.msra.mxu0 0.0
    %81 = vmatprep.subr.mxu0 0.0
    %82 = vmatpush1.msra.mxu0 %v45
    %83 = vmatprep.subr.mxu0 0.0
    %84 = vmatpush1.msra.mxu0 %v44
    %85 = vmatprep.subr.mxu0 0.0
    %86 = vmatpush1.msra.mxu0 %v43
    %87 = vmatprep.subr.mxu0 0.0
    %88 = vmatpush1.msra.mxu0 %v42
    %89 = vmatprep.subr.mxu0 0.0
    %90 = vmatpush2.msra.mxu0 0.0
    %91 = vmatprep.subr.mxu0 0.0
    %92 = vmatpush2.msra.mxu0 0.0
    %93 = vmatprep.subr.mxu0 0.0
    %94 = vmatpush2.msra.mxu0 0.0
    %95 = vmatprep.subr.mxu0 0.0
    %96 = vmatpush2.msra.mxu0 0.0
    %97 = vmatprep.subr.mxu0 0.0
    %98 = vmatpush2.msra.mxu0 0.0
    %99 = vmatprep.subr.mxu0 0.0
    %100 = vmatpush2.msra.mxu0 0.0
    %101 = vmatprep.subr.mxu0 0.0
    %102 = vmatpush2.msra.mxu0 0.0
    %103 = vmatprep.subr.mxu0 0.0
    %104 = vmatpush2.msra.mxu0 0.0
    %105 = vmatprep.subr.mxu0 0.0
    %106 = vmatpush2.msra.mxu0 0.0
    %107 = vmatprep.subr.mxu0 0.0
    %108 = vmatpush2.msra.mxu0 0.0
    %109 = vmatprep.subr.mxu0 0.0
    %110 = vmatpush2.msra.mxu0 0.0
    %111 = vmatprep.subr.mxu0 0.0
    %112 = vmatpush2.msra.mxu0 0.0
    %113 = vmatprep.subr.mxu0 0.0
    %114 = vmatpush2.msra.mxu0 0.0
    %115 = vmatprep.subr.mxu0 0.0
    %116 = vmatpush2.msra.mxu0 0.0
    %117 = vmatprep.subr.mxu0 0.0
    %118 = vmatpush2.msra.mxu0 0.0
    %119 = vmatprep.subr.mxu0 0.0
    %120 = vmatpush2.msra.mxu0 0.0
    %121 = vmatprep.mubr.f32.mxu0 0.0
    %122 = vmatmul.mubr.f32.gmra.mxu0 %v55
    %v123 = vpop.f32.mrf.mxu0
    %v124 = vadd.f32 %v51, %v123
    %v125 = vpop.f32.mrf.mxu0
    %126 = vdwg.mxu0
    %vm127 = vcmp.ge.f32.partialorder %v124, 0.0
    %v128 = vmul.f32 %v124, 0.3
    %v129 = vsel %vm127, %v124, %v128
    %130 = vst.msk [vmem:[#allocation7] sm:$0xff] %vm53, %v129
    // Predicated region
    $region22: #{tpu_custom_call.1} parent=1 // pred_check
      _
    $region23: #{tpu_custom_call.1} parent=1 // pred_check_branch
      %132 = sbr.rel (0) target = $region25
    $region24: #{tpu_custom_call.1} parent=1 // pred_region
      %s134 = ssub.s32 128, 128
      %135 = vsyncadd [#allocation4], %s134
      %s137 = sshll.u32 [#allocation7], 4
      %s138 = int_to_ptr.vmem [resolvable:$true] %s137
      %140 = dma.vmem_to_hbm [thread:$0]  %s138, 128, %s3, [#allocation4]
    $region25: #{tpu_custom_call.1} parent=1 // pred_fallthru
      _
    // Predicated region
    $region26: #{tpu_custom_call.1} parent=1 // pred_check
      _
    $region27: #{tpu_custom_call.1} parent=1 // pred_check_branch
      %142 = sbr.rel (0) target = $region29
    $region28: #{tpu_custom_call.1} parent=1 // pred_region
      %143 = dma.done [#allocation4], 128
    $region29: #{tpu_custom_call.1} parent=1 // pred_fallthru
      _
    %144 = vsyncpa [#allocation3], 1
    %145 = vsyncpa [#allocation6], 1
    %146 = vsyncpa [#allocation4], 1

</llo_original>
